<compile_context>
chip_gen: v7x
topology: tpu7x:2x2x1
jax: 0.10.0
libtpu: 0.0.40
codegen_flags: <defaults>
</compile_context>

<pallas_src>
import functools

import jax
import jax.numpy as jnp
from jax.experimental import pallas as pl
from jax.experimental.pallas import tpu as pltpu


_MIN_TILE_B = 16  # bf16 packs 16 sublanes per vreg -> keep batch tiles multiples of 16


def _round_up(x, m):
    return ((x + m - 1) // m) * m


# ----------------------------------------------------------------------------- kernel ---
def _fused_mlp_kernel(*refs, leaky, n_layers, compute_dtype):
    """Fused MLP: chain of (MXU matmul + fp32 bias add + LeakyReLU), last layer linear.

    refs = (x_ref, w1_ref, b1_ref, ..., wN_ref, bN_ref, o_ref).
    Weights are pre-transposed to (K, out_pad) in `compute_dtype` (bf16 fast path or fp32
    exact path); biases are fp32 (1, out_pad); features are 128-padded so every store is
    lane-dense and unmasked.  Intermediate activations never leave VMEM/vregs.
    """
    x_ref = refs[0]
    o_ref = refs[-1]
    param_refs = refs[1:-1]

    y = x_ref[...].astype(jnp.float32)
    for i in range(n_layers):
        w = param_refs[2 * i][...]          # (K, out_pad), compute_dtype
        b = param_refs[2 * i + 1][...]      # (1, out_pad), fp32 -> broadcasts over rows
        # bf16 operands into the MXU, fp32 accumulation; epilogue stays fp32 on the VPU.
        y = jnp.dot(y.astype(compute_dtype), w,
                    preferred_element_type=jnp.float32) + b
        if i < n_layers - 1:
            if 0.0 <= leaky <= 1.0:
                y = jnp.maximum(y, jnp.float32(leaky) * y)   # single VPU max
            else:
                y = jnp.where(y >= 0, y, jnp.float32(leaky) * y)
    o_ref[...] = y.astype(o_ref.dtype)


# ------------------------------------------------------------------------- parameters ---
def init_real_mvp_params(key, dims, *, bias=True, init_zero=False):
    """Deterministic init mimicking nn.Linear's U(-1/sqrt(fan_in), 1/sqrt(fan_in)).

    Returns PyTorch-layout params: list of (w (out, in), b (out,)), fp32.
    """
    params = []
    n_layers = len(dims) - 1
    for i in range(n_layers):
        fan_in, fan_out = dims[i], dims[i + 1]
        key, kw, kb = jax.random.split(key, 3)
        bound = 1.0 / jnp.sqrt(jnp.float32(fan_in))
        w = jax.random.uniform(kw, (fan_out, fan_in), jnp.float32, -bound, bound)
        if bias:
            b = jax.random.uniform(kb, (fan_out,), jnp.float32, -bound, bound)
        else:
            b = jnp.zeros((fan_out,), jnp.float32)
        if init_zero and i == n_layers - 1:
            w = jnp.zeros_like(w)
            b = jnp.zeros_like(b)
        params.append((w, b))
    return params


def prepare_real_mvp_params(params, *, use_bf16=True):
    """One-time prep (not per forward call):
      - transpose weights to (K, out_pad), zero-pad output features to multiples of 128,
      - first layer keeps K == true in_dim (the input is fed unpadded),
      - later layers' K equals the previous layer's padded width; extra rows are zero, so
        the zero-padded lanes of the previous activation contribute nothing,
      - weights cast to bf16 (fast path) or kept fp32 (exact path); biases fp32 (1, out_pad).
    """
    compute_dtype = jnp.bfloat16 if use_bf16 else jnp.float32
    prepared = []
    for i, (w, b) in enumerate(params):
        out_dim, in_dim = w.shape
        out_pad = _round_up(out_dim, 128)
        k_dim = in_dim if i == 0 else _round_up(in_dim, 128)
        w_t = jnp.zeros((k_dim, out_pad), jnp.float32).at[:in_dim, :out_dim].set(w.T)
        w_t = w_t.astype(compute_dtype)
        b_p = jnp.zeros((1, out_pad), jnp.float32).at[0, :out_dim].set(b)
        prepared.append((w_t, b_p, in_dim, out_dim))
    return prepared


# --------------------------------------------------------------------------- vmem est ---
def _vmem_bytes_estimate(tile_b, in_dim, out_pad, prepared):
    n = 2 * tile_b * in_dim * 4          # double-buffered input block (fp32)
    n += 2 * tile_b * out_pad * 4        # double-buffered output block (fp32)
    for w_t, b_p, _, _ in prepared:      # VMEM-resident weights/biases (one copy per TC)
        n += w_t.size * w_t.dtype.itemsize + b_p.size * 4
    widest = max(w_t.shape[1] for w_t, _, _, _ in prepared)
    n += 3 * tile_b * widest * 4         # live intermediate activations / spill headroom
    return n


# ----------------------------------------------------------------------------- forward ---
def real_mvp_forward(prepared, z, *, leaky=0.0, tile_b_max=512, trim_output=True):
    """Forward pass of RealMVP: (Linear -> LeakyReLU) * (L-1) -> Linear, one fused kernel."""
    n_layers = len(prepared)
    compute_dtype = prepared[0][0].dtype
    batch, in_dim = z.shape
    assert in_dim == prepared[0][2], "input feature dim mismatch"
    out_pad = prepared[-1][0].shape[1]
    out_dim = prepared[-1][3]

    x = z if z.dtype == jnp.float32 else z.astype(jnp.float32)

    # Batch tiling (no wrapper-side batch padding):
    #  * tiny batches: a single block equal to the full batch dim (always a legal block),
    #  * otherwise: >= 2 grid steps (v7x 2-TC sharding), tiles are multiples of 16 and
    #    fitted so the last (masked) tile is not mostly padding. Garbage rows read past
    #    the end of the last tile only feed masked-off output rows (matmul rows are
    #    independent), so no padding copy is needed.
    if batch <= 2 * _MIN_TILE_B:
        tile_b, n_tiles = batch, 1
    else:
        n_tiles = max(2, pl.cdiv(batch, tile_b_max))
        tile_b = _round_up(pl.cdiv(batch, n_tiles), _MIN_TILE_B)
        n_tiles = pl.cdiv(batch, tile_b)

    kernel = functools.partial(_fused_mlp_kernel, leaky=leaky, n_layers=n_layers,
                               compute_dtype=compute_dtype)

    in_specs = [pl.BlockSpec((tile_b, in_dim), lambda i: (i, 0))]
    inputs = [x]
    for w_t, b_p, _, _ in prepared:
        # Constant index_map -> weights/biases stay VMEM-resident across all batch tiles.
        in_specs.append(pl.BlockSpec(w_t.shape, lambda i: (0, 0)))
        in_specs.append(pl.BlockSpec(b_p.shape, lambda i: (0, 0)))
        inputs.append(w_t)
        inputs.append(b_p)

    compiler_kwargs = dict(dimension_semantics=("parallel",))
    vmem_needed = _vmem_bytes_estimate(tile_b, in_dim, out_pad, prepared)
    if vmem_needed > (16 << 20):
        # Raise the scoped-VMEM limit past v5e's 16 MiB default; stay well under v7x's
        # 64 MiB physical VMEM (shrink tile_b_max instead of raising this further).
        compiler_kwargs["vmem_limit_bytes"] = min(int(vmem_needed * 1.5), 48 << 20)

    out = pl.pallas_call(
        kernel,
        out_shape=jax.ShapeDtypeStruct((batch, out_pad), jnp.float32),
        grid_spec=pltpu.PrefetchScalarGridSpec(
            num_scalar_prefetch=0,
            grid=(n_tiles,),
            in_specs=in_specs,
            out_specs=pl.BlockSpec((tile_b, out_pad), lambda i: (i, 0)),
        ),
        compiler_params=pltpu.CompilerParams(**compiler_kwargs),
    )(*inputs)

    if trim_output and out_dim != out_pad:
        # For tiny-batch latency paths, pass trim_output=False and fold this slice into
        # the consumer instead of paying a separate copy op here.
        out = out[:, :out_dim]
    return out


# --------------------------------------------------------------------------- reference ---
def real_mvp_reference(params, z, *, leaky=0.0):
    x = z.astype(jnp.float32)
    n_layers = len(params)
    for i, (w, b) in enumerate(params):
        x = x @ w.T + b
        if i < n_layers - 1:
            x = jnp.where(x >= 0, x, leaky * x)
    return x


# -------------------------------------------------------------------------------- main ---
if __name__ == "__main__":
    key = jax.random.PRNGKey(0)
    dims = (32, 64, 64, 16)   # RealMVP(32, 64, 64, 16, leaky=0.01)
    leaky = 0.01
    batch = 8

    kp, kz = jax.random.split(key)
    params = init_real_mvp_params(kp, dims, bias=True, init_zero=False)
    z = jax.random.normal(kz, (batch, dims[0]), jnp.float32)
    ref = real_mvp_reference(params, z, leaky=leaky)

    # 1) bf16-MXU fast path (default): fp32 accumulation, loose parity vs fp32 reference.
    prepared_bf16 = prepare_real_mvp_params(params, use_bf16=True)
    out = jax.block_until_ready(real_mvp_forward(prepared_bf16, z, leaky=leaky))
    assert out.shape == (batch, dims[-1]), f"bad shape {out.shape}"
    assert jnp.allclose(out, ref, atol=5e-2, rtol=5e-2), "mismatch (bf16 fast path)"

    # 2) fp32 exact mode: tight parity with the pure-JAX reference.
    prepared_f32 = prepare_real_mvp_params(params, use_bf16=False)
    out32 = jax.block_until_ready(real_mvp_forward(prepared_f32, z, leaky=leaky))
    assert jnp.allclose(out32, ref, atol=1e-5, rtol=1e-5), "mismatch (fp32 exact mode)"

    # 3) Multi-tile grid + non-tile-aligned batch (masked last tile), bf16 path.
    z2 = jax.random.normal(jax.random.PRNGKey(1), (40, dims[0]), jnp.float32)
    out2 = jax.block_until_ready(
        real_mvp_forward(prepared_bf16, z2, leaky=leaky, tile_b_max=16))
    ref2 = real_mvp_reference(params, z2, leaky=leaky)
    assert out2.shape == (40, dims[-1])
    assert jnp.allclose(out2, ref2, atol=5e-2, rtol=5e-2), "mismatch (multi-tile path)"

    # 4) init_zero option + odd batch, single full-batch block.
    params_z = init_real_mvp_params(kp, dims, bias=True, init_zero=True)
    prepared_z = prepare_real_mvp_params(params_z, use_bf16=True)
    z3 = jax.random.normal(jax.random.PRNGKey(2), (13, dims[0]), jnp.float32)
    out3 = jax.block_until_ready(real_mvp_forward(prepared_z, z3, leaky=leaky))
    ref3 = real_mvp_reference(params_z, z3, leaky=leaky)
    assert out3.shape == (13, dims[-1])
    assert jnp.allclose(out3, ref3, atol=5e-2, rtol=5e-2), "mismatch (init_zero case)"

    print("KERNEL_OK")
</pallas_src>

<mosaic_0001>
module attributes {stable_mosaic.version = 11 : i64} {
  func.func @_fused_mlp_kernel(%arg0: i32, %arg1: memref<8x32xf32, #tpu.memory_space<vmem>>, %arg2: memref<32x128xbf16, #tpu.memory_space<vmem>>, %arg3: memref<1x128xf32, #tpu.memory_space<vmem>>, %arg4: memref<128x128xbf16, #tpu.memory_space<vmem>>, %arg5: memref<1x128xf32, #tpu.memory_space<vmem>>, %arg6: memref<128x128xbf16, #tpu.memory_space<vmem>>, %arg7: memref<1x128xf32, #tpu.memory_space<vmem>>, %arg8: memref<8x128xf32, #tpu.memory_space<vmem>>) attributes {dimension_semantics = [#tpu.dimension_semantics<parallel>], iteration_bounds = array<i64: 1>, scalar_prefetch = 0 : i64, scratch_operands = 0 : i64, tpu.core_type = #tpu.core_type<tc>, window_params = [{transform_indices = @transform_0, window_bounds = array<i64: 8, 32>}, {pipeline_mode = #tpu.pipeline_mode<synchronous>, transform_indices = @transform_1, window_bounds = array<i64: 32, 128>}, {pipeline_mode = #tpu.pipeline_mode<synchronous>, transform_indices = @transform_2, window_bounds = array<i64: 1, 128>}, {pipeline_mode = #tpu.pipeline_mode<synchronous>, transform_indices = @transform_3, window_bounds = array<i64: 128, 128>}, {pipeline_mode = #tpu.pipeline_mode<synchronous>, transform_indices = @transform_4, window_bounds = array<i64: 1, 128>}, {pipeline_mode = #tpu.pipeline_mode<synchronous>, transform_indices = @transform_5, window_bounds = array<i64: 128, 128>}, {pipeline_mode = #tpu.pipeline_mode<synchronous>, transform_indices = @transform_6, window_bounds = array<i64: 1, 128>}, {transform_indices = @transform_7, window_bounds = array<i64: 8, 128>}]} {
    %c0 = arith.constant 0 : index
    %c0_0 = arith.constant 0 : index
    %0 = vector.load %arg1[%c0, %c0_0] : memref<8x32xf32, #tpu.memory_space<vmem>>, vector<8x32xf32>
    %c0_1 = arith.constant 0 : index
    %c0_2 = arith.constant 0 : index
    %1 = vector.load %arg2[%c0_1, %c0_2] : memref<32x128xbf16, #tpu.memory_space<vmem>>, vector<32x128xbf16>
    %c0_3 = arith.constant 0 : index
    %c0_4 = arith.constant 0 : index
    %2 = vector.load %arg3[%c0_3, %c0_4] : memref<1x128xf32, #tpu.memory_space<vmem>>, vector<1x128xf32>
    %3 = arith.truncf %0 : vector<8x32xf32> to vector<8x32xbf16>
    %cst = arith.constant dense<0.000000e+00> : vector<8x128xf32>
    %4 = tpu.matmul %3, %1, %cst {dimension_numbers = #tpu.dot_dimension_numbers<[1], [0], [0], [1], [0, 0, 1, 1], [], []>} : vector<8x32xbf16>, vector<32x128xbf16>, vector<8x128xf32> -> vector<8x128xf32>
    %5 = vector.broadcast %2 : vector<1x128xf32> to vector<8x128xf32>
    %6 = arith.addf %4, %5 : vector<8x128xf32>
    %cst_5 = arith.constant 0.00999999977 : f32
    %7 = vector.broadcast %cst_5 : f32 to vector<8x128xf32>
    %8 = arith.mulf %7, %6 : vector<8x128xf32>
    %9 = arith.maximumf %6, %8 : vector<8x128xf32>
    %c0_6 = arith.constant 0 : index
    %c0_7 = arith.constant 0 : index
    %10 = vector.load %arg4[%c0_6, %c0_7] : memref<128x128xbf16, #tpu.memory_space<vmem>>, vector<128x128xbf16>
    %c0_8 = arith.constant 0 : index
    %c0_9 = arith.constant 0 : index
    %11 = vector.load %arg5[%c0_8, %c0_9] : memref<1x128xf32, #tpu.memory_space<vmem>>, vector<1x128xf32>
    %12 = arith.truncf %9 : vector<8x128xf32> to vector<8x128xbf16>
    %cst_10 = arith.constant dense<0.000000e+00> : vector<8x128xf32>
    %13 = tpu.matmul %12, %10, %cst_10 {dimension_numbers = #tpu.dot_dimension_numbers<[1], [0], [0], [1], [0, 0, 1, 1], [], []>} : vector<8x128xbf16>, vector<128x128xbf16>, vector<8x128xf32> -> vector<8x128xf32>
    %14 = vector.broadcast %11 : vector<1x128xf32> to vector<8x128xf32>
    %15 = arith.addf %13, %14 : vector<8x128xf32>
    %cst_11 = arith.constant 0.00999999977 : f32
    %16 = vector.broadcast %cst_11 : f32 to vector<8x128xf32>
    %17 = arith.mulf %16, %15 : vector<8x128xf32>
    %18 = arith.maximumf %15, %17 : vector<8x128xf32>
    %c0_12 = arith.constant 0 : index
    %c0_13 = arith.constant 0 : index
    %19 = vector.load %arg6[%c0_12, %c0_13] : memref<128x128xbf16, #tpu.memory_space<vmem>>, vector<128x128xbf16>
    %c0_14 = arith.constant 0 : index
    %c0_15 = arith.constant 0 : index
    %20 = vector.load %arg7[%c0_14, %c0_15] : memref<1x128xf32, #tpu.memory_space<vmem>>, vector<1x128xf32>
    %21 = arith.truncf %18 : vector<8x128xf32> to vector<8x128xbf16>
    %cst_16 = arith.constant dense<0.000000e+00> : vector<8x128xf32>
    %22 = tpu.matmul %21, %19, %cst_16 {dimension_numbers = #tpu.dot_dimension_numbers<[1], [0], [0], [1], [0, 0, 1, 1], [], []>} : vector<8x128xbf16>, vector<128x128xbf16>, vector<8x128xf32> -> vector<8x128xf32>
    %23 = vector.broadcast %20 : vector<1x128xf32> to vector<8x128xf32>
    %24 = arith.addf %22, %23 : vector<8x128xf32>
    %c0_17 = arith.constant 0 : index
    %c0_18 = arith.constant 0 : index
    %25 = vector.load %arg8[%c0_17, %c0_18] : memref<8x128xf32, #tpu.memory_space<vmem>>, vector<8x128xf32>
    tpu.vector_store %arg8[%c0_17, %c0_18], %24 {strides = array<i32>} : memref<8x128xf32, #tpu.memory_space<vmem>>, vector<8x128xf32>,
    return
  }
  func.func @transform_0(%arg0: i32) -> (i32, i32) {
    %c0_i32 = arith.constant 0 : i32
    %c0_i32_0 = arith.constant 0 : i32
    return %arg0, %c0_i32 : i32, i32
  }
  func.func @transform_1(%arg0: i32) -> (i32, i32) {
    %c0_i32 = arith.constant 0 : i32
    %c0_i32_0 = arith.constant 0 : i32
    %c0_i32_1 = arith.constant 0 : i32
    return %c0_i32, %c0_i32_0 : i32, i32
  }
  func.func @transform_2(%arg0: i32) -> (i32, i32) {
    %c0_i32 = arith.constant 0 : i32
    %c0_i32_0 = arith.constant 0 : i32
    %c0_i32_1 = arith.constant 0 : i32
    return %c0_i32, %c0_i32_0 : i32, i32
  }
  func.func @transform_3(%arg0: i32) -> (i32, i32) {
    %c0_i32 = arith.constant 0 : i32
    %c0_i32_0 = arith.constant 0 : i32
    %c0_i32_1 = arith.constant 0 : i32
    return %c0_i32, %c0_i32_0 : i32, i32
  }
  func.func @transform_4(%arg0: i32) -> (i32, i32) {
    %c0_i32 = arith.constant 0 : i32
    %c0_i32_0 = arith.constant 0 : i32
    %c0_i32_1 = arith.constant 0 : i32
    return %c0_i32, %c0_i32_0 : i32, i32
  }
  func.func @transform_5(%arg0: i32) -> (i32, i32) {
    %c0_i32 = arith.constant 0 : i32
    %c0_i32_0 = arith.constant 0 : i32
    %c0_i32_1 = arith.constant 0 : i32
    return %c0_i32, %c0_i32_0 : i32, i32
  }
  func.func @transform_6(%arg0: i32) -> (i32, i32) {
    %c0_i32 = arith.constant 0 : i32
    %c0_i32_0 = arith.constant 0 : i32
    %c0_i32_1 = arith.constant 0 : i32
    return %c0_i32, %c0_i32_0 : i32, i32
  }
  func.func @transform_7(%arg0: i32) -> (i32, i32) {
    %c0_i32 = arith.constant 0 : i32
    %c0_i32_0 = arith.constant 0 : i32
    return %arg0, %c0_i32 : i32, i32
  }
}

</mosaic_0001>

<llo_original>
// kernel: tpu_custom_call.1
$region0: #{tpu_custom_call.1}
  #allocation0 [shape = 'u32[]', space=smem, size = 0x4, offset = 0x4, fixed_abs, tag = 'smem constant byte address 0x4 - core index']
  #allocation1 [shape = 'u32[144,128]{1,0:T(1,128)}', space=vmem, size = 0x12000, scoped, tag = 'internal scratch']
  %s0 = inlined_call_operand.hbm [shape: f32[8,32], index: 0, kind: input, shape index: {}]
  %s1 = inlined_call_operand.hbm [shape: bf16[32,128], index: 1, kind: input, shape index: {}]
  %s2 = inlined_call_operand.vmem [shape: f32[1,128], index: 2, kind: input, shape index: {}]
  %s3 = inlined_call_operand.hbm [shape: bf16[128,128], index: 3, kind: input, shape index: {}]
  %s4 = inlined_call_operand.vmem [shape: f32[1,128], index: 4, kind: input, shape index: {}]
  %s5 = inlined_call_operand.hbm [shape: bf16[128,128], index: 5, kind: input, shape index: {}]
  %s6 = inlined_call_operand.vmem [shape: f32[1,128], index: 6, kind: input, shape index: {}]
  %s7 = inlined_call_operand.hbm [shape: f32[8,128], index: 7, kind: output, shape index: {}]
  %s8 = sld [smem:[#allocation0]]
  $region54: #{tpu_custom_call.1} parent=0
    _
  %s10 = ssub.s32 1, %s8
  %s11 = scalar_select 0, %s10, %s8
  $region1: #{tpu_custom_call.1} parent=0
    #allocation2 [shape = 'u8[4096]{0}', space=vmem, size = 0x1000, scoped, tag = 'input window, operand 0, single buffered']
    #allocation3 [shape = 's32[1]{0}', space=sflag, size = 0x4, scoped, tag = 'scoped memory for tpu_custom_call.1']
    #allocation4 [shape = 's32[1]{0}', space=sflag, size = 0x4, scoped, tag = 'scoped memory for tpu_custom_call.1']
    #allocation5 [shape = 'u8[8192]{0}', space=vmem, size = 0x2000, scoped, tag = 'input window, operand 1, single buffered']
    #allocation6 [shape = 's32[1]{0}', space=sflag, size = 0x4, scoped, tag = 'scoped memory for tpu_custom_call.1']
    #allocation7 [shape = 'u8[32768]{0}', space=vmem, size = 0x8000, scoped, tag = 'input window, operand 3, single buffered']
    #allocation8 [shape = 'u8[32768]{0}', space=vmem, size = 0x8000, scoped, tag = 'input window, operand 5, single buffered']
    #allocation9 [shape = 's32[1]{0}', space=sflag, size = 0x4, scoped, tag = 'scoped memory for tpu_custom_call.1']
    #allocation10 [shape = 'u8[4096]{0}', space=vmem, size = 0x1000, scoped, tag = 'output window, operand 0, single buffered']
    %12 = vsyncpa [#allocation3], 0
    %13 = vsyncpa [#allocation6], 0
    %14 = vsyncpa [#allocation9], 0
    %15 = vsyncpa [#allocation4], 0
    // Predicated region
    $region2: #{tpu_custom_call.1} parent=1 // pred_check
      _
    $region3: #{tpu_custom_call.1} parent=1 // pred_check_branch
      %17 = sbr.rel (0) target = $region5
    $region4: #{tpu_custom_call.1} parent=1 // pred_region
      %s19 = ssub.s32 128, 128
      %20 = vsyncadd [#allocation3], %s19
      %s22 = sshll.u32 [#allocation2], 4
      %s23 = int_to_ptr.vmem [resolvable:$true] %s22
      %25 = dma.hbm_to_vmem [thread:$0]  %s0, 128, %s23, [#allocation3]
    $region5: #{tpu_custom_call.1} parent=1 // pred_fallthru
      _
    // Predicated region
    $region6: #{tpu_custom_call.1} parent=1 // pred_check
      _
    $region7: #{tpu_custom_call.1} parent=1 // pred_check_branch
      %27 = sbr.rel (0) target = $region9
    $region8: #{tpu_custom_call.1} parent=1 // pred_region
      %s29 = ssub.s32 256, 256
      %30 = vsyncadd [#allocation6], %s29
      %s31 = sshll.u32 [#allocation5], 4
      %s32 = int_to_ptr.vmem [resolvable:$true] %s31
      %37 = dma.hbm_to_vmem [thread:$0]  %s1, 256, %s32, [#allocation6], 64, 64, 4
    $region9: #{tpu_custom_call.1} parent=1 // pred_fallthru
      _
    // Predicated region
    $region10: #{tpu_custom_call.1} parent=1 // pred_check
      _
    $region11: #{tpu_custom_call.1} parent=1 // pred_check_branch
      %39 = sbr.rel (0) target = $region13
    $region12: #{tpu_custom_call.1} parent=1 // pred_region
      _
    $region13: #{tpu_custom_call.1} parent=1 // pred_fallthru
      _
    // Predicated region
    $region14: #{tpu_custom_call.1} parent=1 // pred_check
      _
    $region15: #{tpu_custom_call.1} parent=1 // pred_check_branch
      %41 = sbr.rel (0) target = $region17
    $region16: #{tpu_custom_call.1} parent=1 // pred_region
      %s43 = ssub.s32 1024, 1024
      %44 = vsyncadd [#allocation6], %s43
      %s45 = sshll.u32 [#allocation7], 4
      %s46 = int_to_ptr.vmem [resolvable:$true] %s45
      %51 = dma.hbm_to_vmem [thread:$0]  %s3, 1024, %s46, [#allocation6], 64, 64, 4
    $region17: #{tpu_custom_call.1} parent=1 // pred_fallthru
      _
    // Predicated region
    $region18: #{tpu_custom_call.1} parent=1 // pred_check
      _
    $region19: #{tpu_custom_call.1} parent=1 // pred_check_branch
      %53 = sbr.rel (0) target = $region21
    $region20: #{tpu_custom_call.1} parent=1 // pred_region
      _
    $region21: #{tpu_custom_call.1} parent=1 // pred_fallthru
      _
    // Predicated region
    $region22: #{tpu_custom_call.1} parent=1 // pred_check
      _
    $region23: #{tpu_custom_call.1} parent=1 // pred_check_branch
      %55 = sbr.rel (0) target = $region25
    $region24: #{tpu_custom_call.1} parent=1 // pred_region
      %s57 = ssub.s32 1024, 1024
      %58 = vsyncadd [#allocation9], %s57
      %s59 = sshll.u32 [#allocation8], 4
      %s60 = int_to_ptr.vmem [resolvable:$true] %s59
      %65 = dma.hbm_to_vmem [thread:$0]  %s5, 1024, %s60, [#allocation9], 64, 64, 4
    $region25: #{tpu_custom_call.1} parent=1 // pred_fallthru
      _
    // Predicated region
    $region26: #{tpu_custom_call.1} parent=1 // pred_check
      _
    $region27: #{tpu_custom_call.1} parent=1 // pred_check_branch
      %67 = sbr.rel (0) target = $region29
    $region28: #{tpu_custom_call.1} parent=1 // pred_region
      _
    $region29: #{tpu_custom_call.1} parent=1 // pred_fallthru
      _
    // Predicated region
    $region30: #{tpu_custom_call.1} parent=1 // pred_check
      _
    $region31: #{tpu_custom_call.1} parent=1 // pred_check_branch
      %69 = sbr.rel (0) target = $region33
    $region32: #{tpu_custom_call.1} parent=1 // pred_region
      %70 = dma.done [#allocation3], 128
    $region33: #{tpu_custom_call.1} parent=1 // pred_fallthru
      _
    // Predicated region
    $region34: #{tpu_custom_call.1} parent=1 // pred_check
      _
    $region35: #{tpu_custom_call.1} parent=1 // pred_check_branch
      %72 = sbr.rel (0) target = $region37
    $region36: #{tpu_custom_call.1} parent=1 // pred_region
      %73 = dma.done [#allocation6], 256
    $region37: #{tpu_custom_call.1} parent=1 // pred_fallthru
      _
    // Predicated region
    $region38: #{tpu_custom_call.1} parent=1 // pred_check
      _
    $region39: #{tpu_custom_call.1} parent=1 // pred_check_branch
      %75 = sbr.rel (0) target = $region41
    $region40: #{tpu_custom_call.1} parent=1 // pred_region
      %76 = dma.done [#allocation6], 1024
    $region41: #{tpu_custom_call.1} parent=1 // pred_fallthru
      _
    // Predicated region
    $region42: #{tpu_custom_call.1} parent=1 // pred_check
      _
    $region43: #{tpu_custom_call.1} parent=1 // pred_check_branch
      %78 = sbr.rel (0) target = $region45
    $region44: #{tpu_custom_call.1} parent=1 // pred_region
      %79 = dma.done [#allocation9], 1024
    $region45: #{tpu_custom_call.1} parent=1 // pred_fallthru
      _
    %v81 = vld [vmem:[#allocation2] sm:$0xff]
    %v82 = vld [vmem:[#allocation5] sm:$0xf]
    %v83 = vld [vmem:[#allocation5 + $0x4] sm:$0xf]
    %v84 = vld [vmem:[#allocation5 + $0x8] sm:$0xf]
    %v85 = vld [vmem:[#allocation5 + $0xc] sm:$0xf]
    %v86 = vld [vmem:[%s2] sm:$0x1]
    %v87 = vpack.c.bf16 %v81, %v81
    %v89 = vlaneseq
    %v90 = vshrl.u32 %v89, 7
    %v91 = vsub.s32 0, %v90
    %v92 = vrot.slane %v86, %v91
    %v98 = vunpack.c.l.b16 %v82
    %v99 = vunpack.c.l.b16 %v83
    %v100 = vunpack.c.l.b16 %v84
    %v101 = vunpack.c.l.b16 %v85
    %v102 = vpack.c.b16 %v99, %v98
    %v103 = vpack.c.b16 %v101, %v100
    %vm106 = vcmask 261120
    %v108 = vsel %vm106, %v87, 0
    %110 = vmatprep.subr.bf16.mxu0 0
    %111 = vmatpush1.bf16.msra.mxu0 %v102
    %112 = vmatprep.subr.bf16.mxu0 0
    %113 = vmatpush1.bf16.msra.mxu0 %v103
    %114 = vmatprep.subr.bf16.mxu0 0
    %115 = vmatpush1.bf16.msra.mxu0 0
    %116 = vmatprep.subr.bf16.mxu0 0
    %117 = vmatpush1.bf16.msra.mxu0 0
    %118 = vmatprep.subr.bf16.mxu0 0
    %119 = vmatpush1.bf16.msra.mxu0 0
    %120 = vmatprep.subr.bf16.mxu0 0
    %121 = vmatpush1.bf16.msra.mxu0 0
    %122 = vmatprep.subr.bf16.mxu0 0
    %123 = vmatpush1.bf16.msra.mxu0 0
    %124 = vmatprep.subr.bf16.mxu0 0
    %125 = vmatpush1.bf16.msra.mxu0 0
    %126 = vmatprep.subr.bf16.mxu0 0
    %127 = vmatpush1.bf16.msra.mxu0 0
    %128 = vmatprep.subr.bf16.mxu0 0
    %129 = vmatpush1.bf16.msra.mxu0 0
    %130 = vmatprep.subr.bf16.mxu0 0
    %131 = vmatpush1.bf16.msra.mxu0 0
    %132 = vmatprep.subr.bf16.mxu0 0
    %133 = vmatpush1.bf16.msra.mxu0 0
    %134 = vmatprep.subr.bf16.mxu0 0
    %135 = vmatpush1.bf16.msra.mxu0 0
    %136 = vmatprep.subr.bf16.mxu0 0
    %137 = vmatpush1.bf16.msra.mxu0 0
    %138 = vmatprep.subr.bf16.mxu0 0
    %139 = vmatpush1.bf16.msra.mxu0 0
    %140 = vmatprep.subr.bf16.mxu0 0
    %141 = vmatpush1.bf16.msra.mxu0 0
    %142 = vmatprep.mubr.bf16.mxu0 0
    %143 = vmatmul.mubr.bf16.gmra.mrb[0].mxu0 %v108
    %v144 = vpop.f32.mrb[0].mxu0
    %v145 = vadd.f32 %v92, %v144
    %v146 = vpop.f32.mrb[0].mxu0
    %v147 = vpop.f32.mrb[0].mxu0
    %v148 = vpop.f32.mrb[0].mxu0
    %149 = vdwg.mxu0
    %v150 = vmul.f32 %v145, 0.01
    %v151 = vmax.f32 %v145, %v150
    %v152 = vld [vmem:[#allocation7] sm:$0xf]
    %v153 = vld [vmem:[#allocation7 + $0x4] sm:$0xf]
    %v154 = vld [vmem:[#allocation7 + $0x8] sm:$0xf]
    %v155 = vld [vmem:[#allocation7 + $0xc] sm:$0xf]
    %v156 = vld [vmem:[#allocation7 + $0x10] sm:$0xf]
    %v157 = vld [vmem:[#allocation7 + $0x14] sm:$0xf]
    %v158 = vld [vmem:[#allocation7 + $0x18] sm:$0xf]
    %v159 = vld [vmem:[#allocation7 + $0x1c] sm:$0xf]
    %v160 = vld [vmem:[#allocation7 + $0x20] sm:$0xf]
    %v161 = vld [vmem:[#allocation7 + $0x24] sm:$0xf]
    %v162 = vld [vmem:[#allocation7 + $0x28] sm:$0xf]
    %v163 = vld [vmem:[#allocation7 + $0x2c] sm:$0xf]
    %v164 = vld [vmem:[#allocation7 + $0x30] sm:$0xf]
    %v165 = vld [vmem:[#allocation7 + $0x34] sm:$0xf]
    %v166 = vld [vmem:[#allocation7 + $0x38] sm:$0xf]
    %v167 = vld [vmem:[#allocation7 + $0x3c] sm:$0xf]
    %v168 = vld [vmem:[%s4] sm:$0x1]
    %v169 = vpack.c.bf16 %v151, %v151
    %v171 = vlaneseq
    %v172 = vshrl.u32 %v171, 7
    %v173 = vsub.s32 0, %v172
    %v174 = vrot.slane %v168, %v173
    %v192 = vunpack.c.l.b16 %v152
    %v193 = vunpack.c.l.b16 %v153
    %v194 = vunpack.c.l.b16 %v154
    %v195 = vunpack.c.l.b16 %v155
    %v196 = vunpack.c.l.b16 %v156
    %v197 = vunpack.c.l.b16 %v157
    %v198 = vunpack.c.l.b16 %v158
    %v199 = vunpack.c.l.b16 %v159
    %v200 = vunpack.c.l.b16 %v160
    %v201 = vunpack.c.l.b16 %v161
    %v202 = vunpack.c.l.b16 %v162
    %v203 = vunpack.c.l.b16 %v163
    %v204 = vunpack.c.l.b16 %v164
    %v205 = vunpack.c.l.b16 %v165
    %v206 = vunpack.c.l.b16 %v166
    %v207 = vunpack.c.l.b16 %v167
    %v208 = vpack.c.b16 %v193, %v192
    %v209 = vpack.c.b16 %v195, %v194
    %v210 = vpack.c.b16 %v197, %v196
    %v211 = vpack.c.b16 %v199, %v198
    %v212 = vpack.c.b16 %v201, %v200
    %v213 = vpack.c.b16 %v203, %v202
    %v214 = vpack.c.b16 %v205, %v204
    %v215 = vpack.c.b16 %v207, %v206
    %224 = vmatprep.subr.bf16.mxu0 0
    %225 = vmatpush1.bf16.msra.mxu0 %v208
    %226 = vmatprep.subr.bf16.mxu0 0
    %227 = vmatpush1.bf16.msra.mxu0 %v209
    %228 = vmatprep.subr.bf16.mxu0 0
    %229 = vmatpush1.bf16.msra.mxu0 %v210
    %230 = vmatprep.subr.bf16.mxu0 0
    %231 = vmatpush1.bf16.msra.mxu0 %v211
    %232 = vmatprep.subr.bf16.mxu0 0
    %233 = vmatpush1.bf16.msra.mxu0 %v212
    %234 = vmatprep.subr.bf16.mxu0 0
    %235 = vmatpush1.bf16.msra.mxu0 %v213
    %236 = vmatprep.subr.bf16.mxu0 0
    %237 = vmatpush1.bf16.msra.mxu0 %v214
    %238 = vmatprep.subr.bf16.mxu0 0
    %239 = vmatpush1.bf16.msra.mxu0 %v215
    %240 = vmatprep.subr.bf16.mxu0 0
    %241 = vmatpush1.bf16.msra.mxu0 0
    %242 = vmatprep.subr.bf16.mxu0 0
    %243 = vmatpush1.bf16.msra.mxu0 0
    %244 = vmatprep.subr.bf16.mxu0 0
    %245 = vmatpush1.bf16.msra.mxu0 0
    %246 = vmatprep.subr.bf16.mxu0 0
    %247 = vmatpush1.bf16.msra.mxu0 0
    %248 = vmatprep.subr.bf16.mxu0 0
    %249 = vmatpush1.bf16.msra.mxu0 0
    %250 = vmatprep.subr.bf16.mxu0 0
    %251 = vmatpush1.bf16.msra.mxu0 0
    %252 = vmatprep.subr.bf16.mxu0 0
    %253 = vmatpush1.bf16.msra.mxu0 0
    %254 = vmatprep.subr.bf16.mxu0 0
    %255 = vmatpush1.bf16.msra.mxu0 0
    %256 = vmatprep.mubr.bf16.mxu0 0
    %257 = vmatmul.mubr.bf16.gmra.mrb[0].mxu0 %v169
    %v258 = vpop.f32.mrb[0].mxu0
    %v259 = vadd.f32 %v174, %v258
    %v260 = vpop.f32.mrb[0].mxu0
    %v261 = vpop.f32.mrb[0].mxu0
    %v262 = vpop.f32.mrb[0].mxu0
    %263 = vdwg.mxu0
    %v264 = vmul.f32 %v259, 0.01
    %v265 = vmax.f32 %v259, %v264
    %v266 = vld [vmem:[#allocation8] sm:$0xf]
    %v267 = vld [vmem:[#allocation8 + $0x4] sm:$0xf]
    %v268 = vld [vmem:[#allocation8 + $0x8] sm:$0xf]
    %v269 = vld [vmem:[#allocation8 + $0xc] sm:$0xf]
    %v270 = vld [vmem:[#allocation8 + $0x10] sm:$0xf]
    %v271 = vld [vmem:[#allocation8 + $0x14] sm:$0xf]
    %v272 = vld [vmem:[#allocation8 + $0x18] sm:$0xf]
    %v273 = vld [vmem:[#allocation8 + $0x1c] sm:$0xf]
    %v274 = vld [vmem:[#allocation8 + $0x20] sm:$0xf]
    %v275 = vld [vmem:[#allocation8 + $0x24] sm:$0xf]
    %v276 = vld [vmem:[#allocation8 + $0x28] sm:$0xf]
    %v277 = vld [vmem:[#allocation8 + $0x2c] sm:$0xf]
    %v278 = vld [vmem:[#allocation8 + $0x30] sm:$0xf]
    %v279 = vld [vmem:[#allocation8 + $0x34] sm:$0xf]
    %v280 = vld [vmem:[#allocation8 + $0x38] sm:$0xf]
    %v281 = vld [vmem:[#allocation8 + $0x3c] sm:$0xf]
    %v282 = vld [vmem:[%s6] sm:$0x1]
    %v283 = vpack.c.bf16 %v265, %v265
    %v285 = vlaneseq
    %v286 = vshrl.u32 %v285, 7
    %v287 = vsub.s32 0, %v286
    %v288 = vrot.slane %v282, %v287
    %v306 = vunpack.c.l.b16 %v266
    %v307 = vunpack.c.l.b16 %v267
    %v308 = vunpack.c.l.b16 %v268
    %v309 = vunpack.c.l.b16 %v269
    %v310 = vunpack.c.l.b16 %v270
    %v311 = vunpack.c.l.b16 %v271
    %v312 = vunpack.c.l.b16 %v272
    %v313 = vunpack.c.l.b16 %v273
    %v314 = vunpack.c.l.b16 %v274
    %v315 = vunpack.c.l.b16 %v275
    %v316 = vunpack.c.l.b16 %v276
    %v317 = vunpack.c.l.b16 %v277
    %v318 = vunpack.c.l.b16 %v278
    %v319 = vunpack.c.l.b16 %v279
    %v320 = vunpack.c.l.b16 %v280
    %v321 = vunpack.c.l.b16 %v281
    %v322 = vpack.c.b16 %v307, %v306
    %v323 = vpack.c.b16 %v309, %v308
    %v324 = vpack.c.b16 %v311, %v310
    %v325 = vpack.c.b16 %v313, %v312
    %v326 = vpack.c.b16 %v315, %v314
    %v327 = vpack.c.b16 %v317, %v316
    %v328 = vpack.c.b16 %v319, %v318
    %v329 = vpack.c.b16 %v321, %v320
    %338 = vmatprep.subr.bf16.mxu0 0
    %339 = vmatpush1.bf16.msra.mxu0 %v322
    %340 = vmatprep.subr.bf16.mxu0 0
    %341 = vmatpush1.bf16.msra.mxu0 %v323
    %342 = vmatprep.subr.bf16.mxu0 0
    %343 = vmatpush1.bf16.msra.mxu0 %v324
    %344 = vmatprep.subr.bf16.mxu0 0
    %345 = vmatpush1.bf16.msra.mxu0 %v325
    %346 = vmatprep.subr.bf16.mxu0 0
    %347 = vmatpush1.bf16.msra.mxu0 %v326
    %348 = vmatprep.subr.bf16.mxu0 0
    %349 = vmatpush1.bf16.msra.mxu0 %v327
    %350 = vmatprep.subr.bf16.mxu0 0
    %351 = vmatpush1.bf16.msra.mxu0 %v328
    %352 = vmatprep.subr.bf16.mxu0 0
    %353 = vmatpush1.bf16.msra.mxu0 %v329
    %354 = vmatprep.subr.bf16.mxu0 0
    %355 = vmatpush1.bf16.msra.mxu0 0
    %356 = vmatprep.subr.bf16.mxu0 0
    %357 = vmatpush1.bf16.msra.mxu0 0
    %358 = vmatprep.subr.bf16.mxu0 0
    %359 = vmatpush1.bf16.msra.mxu0 0
    %360 = vmatprep.subr.bf16.mxu0 0
    %361 = vmatpush1.bf16.msra.mxu0 0
    %362 = vmatprep.subr.bf16.mxu0 0
    %363 = vmatpush1.bf16.msra.mxu0 0
    %364 = vmatprep.subr.bf16.mxu0 0
    %365 = vmatpush1.bf16.msra.mxu0 0
    %366 = vmatprep.subr.bf16.mxu0 0
    %367 = vmatpush1.bf16.msra.mxu0 0
    %368 = vmatprep.subr.bf16.mxu0 0
    %369 = vmatpush1.bf16.msra.mxu0 0
    %370 = vmatprep.mubr.bf16.mxu0 0
    %371 = vmatmul.mubr.bf16.gmra.mrb[0].mxu0 %v283
    %v372 = vpop.f32.mrb[0].mxu0
    %v373 = vadd.f32 %v288, %v372
    %v374 = vpop.f32.mrb[0].mxu0
    %v375 = vpop.f32.mrb[0].mxu0
    %v376 = vpop.f32.mrb[0].mxu0
    %377 = vdwg.mxu0
    %378 = vst [vmem:[#allocation10] sm:$0xff] %v373
    // Predicated region
    $region46: #{tpu_custom_call.1} parent=1 // pred_check
      _
    $region47: #{tpu_custom_call.1} parent=1 // pred_check_branch
      %380 = sbr.rel (0) target = $region49
    $region48: #{tpu_custom_call.1} parent=1 // pred_region
      %s382 = ssub.s32 128, 128
      %383 = vsyncadd [#allocation4], %s382
      %s385 = sshll.u32 [#allocation10], 4
      %s386 = int_to_ptr.vmem [resolvable:$true] %s385
      %388 = dma.vmem_to_hbm [thread:$0]  %s386, 128, %s7, [#allocation4]
    $region49: #{tpu_custom_call.1} parent=1 // pred_fallthru
      _
    // Predicated region
    $region50: #{tpu_custom_call.1} parent=1 // pred_check
      _
    $region51: #{tpu_custom_call.1} parent=1 // pred_check_branch
      %390 = sbr.rel (0) target = $region53
    $region52: #{tpu_custom_call.1} parent=1 // pred_region
      %391 = dma.done [#allocation4], 128
    $region53: #{tpu_custom_call.1} parent=1 // pred_fallthru
      _
    %392 = vsyncpa [#allocation3], 1
    %393 = vsyncpa [#allocation6], 1
    %394 = vsyncpa [#allocation9], 1
    %395 = vsyncpa [#allocation4], 1

</llo_original>
